<compile_context>
chip_gen: v7x
topology: tpu7x:2x2x1
jax: 0.10.0
libtpu: 0.0.40
codegen_flags: <defaults>
</compile_context>

<pallas_src>
import functools

import jax
import jax.numpy as jnp
from jax.experimental import pallas as pl
from jax.experimental.pallas import tpu as pltpu


def _supervised_loss_kernel(base_ref, pred_ref, truth_ref, out_ref, *, H, W, b_tile):
    """One grid step: b_tile batch elements -> one lane-dense partial sq-sum."""
    HW = H * W

    # Per-point base pixel coords (lane-dense, resident): row 0 = w, row 1 = h.
    base = base_ref[...]                                   # (2, HW) f32
    bx = base[0:1, :]                                      # (1, HW)
    by = base[1:2, :]

    # Hat-weight iotas (source pixel index on the sublane axis) — hoisted
    # out of the batch loop, computed once per grid step.
    hh = jax.lax.broadcasted_iota(jnp.int32, (H, HW), 0).astype(jnp.float32)
    ww = jax.lax.broadcasted_iota(jnp.int32, (W, HW), 0).astype(jnp.float32)

    half_wm1 = jnp.float32(0.5 * (W - 1))
    half_hm1 = jnp.float32(0.5 * (H - 1))

    def body(b, acc):
        pred = pred_ref[b].astype(jnp.float32)             # (2, HW)
        t_blk = truth_ref[b].astype(jnp.float32)           # (2W, H): [c*W+w, h]

        px = pred[0:1, :]                                   # (1, HW) x-displacement
        py = pred[1:2, :]                                   # (1, HW) y-displacement

        # Absolute pixel-space sampling coords, 'border'-clamped BEFORE weights
        # (align_corners=True unnormalize folded: (g+1)/2*(D-1) = base + disp*(D-1)/2).
        fx = jnp.clip(bx + px * half_wm1, 0.0, W - 1.0)     # (1, HW)
        fy = jnp.clip(by + py * half_hm1, 0.0, H - 1.0)

        # ---- stage 1: y interpolation via hat weights + one MXU matmul ----
        row_w = jnp.maximum(0.0, 1.0 - jnp.abs(hh - fy))    # (H, HW)
        row_interp = jnp.dot(t_blk, row_w,
                             preferred_element_type=jnp.float32)   # (2W, HW)

        # ---- stage 2: x interpolation, one shared hat mask for both channels ----
        xmask = jnp.maximum(0.0, 1.0 - jnp.abs(ww - fx))    # (W, HW)
        s0 = jnp.sum(xmask * row_interp[:W, :], axis=0, keepdims=True)   # (1, HW)
        s1 = jnp.sum(xmask * row_interp[W:, :], axis=0, keepdims=True)   # (1, HW)

        b0 = px + s0
        b1 = py + s1
        return acc + b0 * b0 + b1 * b1

    acc = jax.lax.fori_loop(0, b_tile, body, jnp.zeros((1, HW), jnp.float32))

    # Lane-dense partial-sum write; wrapper reduces across grid steps.
    out_ref[...] = jnp.full((1, 128), jnp.sum(acc), dtype=jnp.float32)


@jax.jit
def supervised_loss(prediction, truth):
    """prediction, truth: (N, H, W, 2) float32 residual vector fields."""
    N, H, W, C = prediction.shape
    assert C == 2 and truth.shape == prediction.shape
    assert H >= 2 and W >= 2, "identity grid needs H, W >= 2"
    HW = H * W

    # Channel-planar layouts (one small XLA transpose each, done once):
    #   pred2[n, c, h*W + w]   = prediction[n, h, w, c]      (N, 2, HW)
    #   truth2[n, c*W + w, h]  = truth[n, h, w, c]           (N, 2W, H)
    pred2 = prediction.transpose(0, 3, 1, 2).reshape(N, 2, HW).astype(jnp.float32)
    truth2 = truth.transpose(0, 3, 2, 1).reshape(N, 2 * W, H).astype(jnp.float32)

    # Base pixel coords per point (lane-dense rows), resident across steps.
    hh, ww = jnp.meshgrid(jnp.arange(H, dtype=jnp.float32),
                          jnp.arange(W, dtype=jnp.float32), indexing="ij")
    base = jnp.stack([ww.ravel(), hh.ravel()], axis=0)      # (2, HW)

    # Batch tile: guarantee >=2 grid steps when N>=2 (v7x megacore); divide N.
    b_tile = min(max(N // 2, 1), 8)
    while N % b_tile:
        b_tile -= 1
    n_steps = N // b_tile

    # VMEM budget: double-buffered input tiles + fori-bounded temporaries.
    inputs_bytes = 2 * b_tile * (2 * HW + 2 * W * H) * 4
    temps_bytes = 4 * HW * (2 * H + 4 * W)
    vmem_limit = int(min(100 * 1024 * 1024,
                         max(32 * 1024 * 1024, 2 * (inputs_bytes + temps_bytes))))

    kernel = functools.partial(_supervised_loss_kernel, H=H, W=W, b_tile=b_tile)
    partials = pl.pallas_call(
        kernel,
        out_shape=jax.ShapeDtypeStruct((1, 128 * n_steps), jnp.float32),
        grid_spec=pltpu.PrefetchScalarGridSpec(
            num_scalar_prefetch=0,
            grid=(n_steps,),
            in_specs=[
                pl.BlockSpec((2, HW), lambda g: (0, 0)),                 # base coords (resident)
                pl.BlockSpec((b_tile, 2, HW), lambda g: (g, 0, 0)),      # prediction tile
                pl.BlockSpec((b_tile, 2 * W, H), lambda g: (g, 0, 0)),   # truth tile
            ],
            out_specs=pl.BlockSpec((1, 128), lambda g: (0, g)),
        ),
        compiler_params=pltpu.CompilerParams(
            dimension_semantics=("parallel",),
            vmem_limit_bytes=vmem_limit),
    )(base, pred2, truth2)

    per_step = partials.reshape(n_steps, 128)[:, 0]
    total_elems = N * HW * 2
    return jnp.sum(per_step) * (2.0 / total_elems)


def _supervised_loss_reference(prediction, truth):
    """Pure-JAX reference (gather-based grid_sample, border, align_corners=True)."""
    N, H, W, C = prediction.shape
    ys = jnp.linspace(-1.0, 1.0, H)
    xs = jnp.linspace(-1.0, 1.0, W)
    id_y, id_x = jnp.meshgrid(ys, xs, indexing="ij")
    gx = prediction[..., 0] + id_x[None]
    gy = prediction[..., 1] + id_y[None]
    fx = jnp.clip((gx + 1.0) * (W - 1) * 0.5, 0.0, W - 1.0)
    fy = jnp.clip((gy + 1.0) * (H - 1) * 0.5, 0.0, H - 1.0)
    x0f = jnp.floor(fx)
    y0f = jnp.floor(fy)
    wx1 = fx - x0f
    wx0 = 1.0 - wx1
    wy1 = fy - y0f
    wy0 = 1.0 - wy1
    x0 = jnp.clip(x0f.astype(jnp.int32), 0, W - 1)
    x1 = jnp.clip(x0f.astype(jnp.int32) + 1, 0, W - 1)
    y0 = jnp.clip(y0f.astype(jnp.int32), 0, H - 1)
    y1 = jnp.clip(y0f.astype(jnp.int32) + 1, 0, H - 1)

    bi = jnp.arange(N)[:, None, None]

    def gather(yi, xi):
        return truth[bi, yi, xi, :]  # (N, H, W, C)

    sampled = (wy0[..., None] * wx0[..., None] * gather(y0, x0)
               + wy0[..., None] * wx1[..., None] * gather(y0, x1)
               + wy1[..., None] * wx0[..., None] * gather(y1, x0)
               + wy1[..., None] * wx1[..., None] * gather(y1, x1))
    backward = prediction + sampled
    return jnp.mean(backward ** 2) * 2.0


if __name__ == "__main__":
    key = jax.random.PRNGKey(0)
    k1, k2 = jax.random.split(key)
    N, H, W, C = 2, 16, 16, 2
    prediction = 0.1 * jax.random.normal(k1, (N, H, W, C), dtype=jnp.float32)
    truth = 0.1 * jax.random.normal(k2, (N, H, W, C), dtype=jnp.float32)

    loss = jax.block_until_ready(supervised_loss(prediction, truth))
    ref = jax.block_until_ready(_supervised_loss_reference(prediction, truth))
    assert jnp.allclose(loss, ref, rtol=1e-3, atol=1e-5), (loss, ref)
    print("KERNEL_OK")
</pallas_src>

<mosaic_0001>
module attributes {stable_mosaic.version = 11 : i64} {
  func.func @_supervised_loss_kernel(%arg0: i32, %arg1: memref<2x256xf32, #tpu.memory_space<vmem>>, %arg2: memref<1x2x256xf32, #tpu.memory_space<vmem>>, %arg3: memref<1x32x16xf32, #tpu.memory_space<vmem>>, %arg4: memref<1x128xf32, #tpu.memory_space<vmem>>) attributes {dimension_semantics = [#tpu.dimension_semantics<parallel>], iteration_bounds = array<i64: 2>, scalar_prefetch = 0 : i64, scratch_operands = 0 : i64, tpu.core_type = #tpu.core_type<tc>, window_params = [{pipeline_mode = #tpu.pipeline_mode<synchronous>, transform_indices = @transform_0, window_bounds = array<i64: 2, 256>}, {transform_indices = @transform_1, window_bounds = array<i64: 1, 2, 256>}, {transform_indices = @transform_2, window_bounds = array<i64: 1, 32, 16>}, {transform_indices = @transform_3, window_bounds = array<i64: 1, 128>}]} {
    %c0 = arith.constant 0 : index
    %c0_0 = arith.constant 0 : index
    %0 = vector.load %arg1[%c0, %c0_0] : memref<2x256xf32, #tpu.memory_space<vmem>>, vector<2x256xf32>
    %1 = vector.extract_strided_slice %0 {offsets = [0, 0], sizes = [1, 256], strides = [1, 1]} : vector<2x256xf32> to vector<1x256xf32>
    %2 = vector.extract_strided_slice %0 {offsets = [1, 0], sizes = [1, 256], strides = [1, 1]} : vector<2x256xf32> to vector<1x256xf32>
    %3 = tpu.iota {dimensions = array<i32: 0>} : vector<16x256xi32>
    %4 = arith.sitofp %3 : vector<16x256xi32> to vector<16x256xf32>
    %5 = tpu.iota {dimensions = array<i32: 0>} : vector<16x256xi32>
    %6 = arith.sitofp %5 : vector<16x256xi32> to vector<16x256xf32>
    %cst = arith.constant 0.000000e+00 : f32
    %7 = vector.broadcast %cst : f32 to vector<1x256xf32>
    %cst_1 = arith.constant 7.500000e+00 : f32
    %cst_2 = arith.constant 7.500000e+00 : f32
    %c0_i32 = arith.constant 0 : i32
    %8 = arith.index_cast %c0_i32 : i32 to index
    %c0_3 = arith.constant 0 : index
    %c0_4 = arith.constant 0 : index
    %9 = vector.load %arg2[%8, %c0_3, %c0_4] : memref<1x2x256xf32, #tpu.memory_space<vmem>>, vector<1x2x256xf32>
    %10 = vector.shape_cast %9 : vector<1x2x256xf32> to vector<2x256xf32>
    %11 = arith.index_cast %c0_i32 : i32 to index
    %c0_5 = arith.constant 0 : index
    %c0_6 = arith.constant 0 : index
    %12 = vector.load %arg3[%11, %c0_5, %c0_6] : memref<1x32x16xf32, #tpu.memory_space<vmem>>, vector<1x32x16xf32>
    %13 = vector.shape_cast %12 : vector<1x32x16xf32> to vector<32x16xf32>
    %14 = vector.extract_strided_slice %10 {offsets = [0, 0], sizes = [1, 256], strides = [1, 1]} : vector<2x256xf32> to vector<1x256xf32>
    %15 = vector.extract_strided_slice %10 {offsets = [1, 0], sizes = [1, 256], strides = [1, 1]} : vector<2x256xf32> to vector<1x256xf32>
    %16 = vector.broadcast %cst_1 : f32 to vector<1x256xf32>
    %17 = arith.mulf %14, %16 : vector<1x256xf32>
    %18 = arith.addf %1, %17 : vector<1x256xf32>
    %cst_7 = arith.constant 0.000000e+00 : f32
    %cst_8 = arith.constant 1.500000e+01 : f32
    %19 = vector.broadcast %cst_7 : f32 to vector<1x256xf32>
    %20 = arith.maximumf %19, %18 : vector<1x256xf32>
    %21 = vector.broadcast %cst_8 : f32 to vector<1x256xf32>
    %22 = arith.minimumf %21, %20 : vector<1x256xf32>
    %23 = vector.broadcast %cst_2 : f32 to vector<1x256xf32>
    %24 = arith.mulf %15, %23 : vector<1x256xf32>
    %25 = arith.addf %2, %24 : vector<1x256xf32>
    %cst_9 = arith.constant 0.000000e+00 : f32
    %cst_10 = arith.constant 1.500000e+01 : f32
    %26 = vector.broadcast %cst_9 : f32 to vector<1x256xf32>
    %27 = arith.maximumf %26, %25 : vector<1x256xf32>
    %28 = vector.broadcast %cst_10 : f32 to vector<1x256xf32>
    %29 = arith.minimumf %28, %27 : vector<1x256xf32>
    %30 = vector.broadcast %29 : vector<1x256xf32> to vector<16x256xf32>
    %31 = arith.subf %4, %30 : vector<16x256xf32>
    %32 = math.absf %31 : vector<16x256xf32>
    %cst_11 = arith.constant 1.000000e+00 : f32
    %33 = vector.broadcast %cst_11 : f32 to vector<16x256xf32>
    %34 = arith.subf %33, %32 : vector<16x256xf32>
    %cst_12 = arith.constant 0.000000e+00 : f32
    %35 = vector.broadcast %cst_12 : f32 to vector<16x256xf32>
    %36 = arith.maximumf %35, %34 : vector<16x256xf32>
    %cst_13 = arith.constant dense<0.000000e+00> : vector<32x256xf32>
    %37 = tpu.matmul %13, %36, %cst_13 {dimension_numbers = #tpu.dot_dimension_numbers<[1], [0], [0], [1], [0, 0, 1, 1], [], []>} : vector<32x16xf32>, vector<16x256xf32>, vector<32x256xf32> -> vector<32x256xf32>
    %38 = vector.broadcast %22 : vector<1x256xf32> to vector<16x256xf32>
    %39 = arith.subf %6, %38 : vector<16x256xf32>
    %40 = math.absf %39 : vector<16x256xf32>
    %cst_14 = arith.constant 1.000000e+00 : f32
    %41 = vector.broadcast %cst_14 : f32 to vector<16x256xf32>
    %42 = arith.subf %41, %40 : vector<16x256xf32>
    %cst_15 = arith.constant 0.000000e+00 : f32
    %43 = vector.broadcast %cst_15 : f32 to vector<16x256xf32>
    %44 = arith.maximumf %43, %42 : vector<16x256xf32>
    %45 = vector.extract_strided_slice %37 {offsets = [0, 0], sizes = [16, 256], strides = [1, 1]} : vector<32x256xf32> to vector<16x256xf32>
    %46 = arith.mulf %44, %45 : vector<16x256xf32>
    %cst_16 = arith.constant dense<0.000000e+00> : vector<256xf32>
    %47 = vector.multi_reduction <add>, %46, %cst_16 [0] : vector<16x256xf32> to vector<256xf32>
    %48 = vector.shape_cast %47 : vector<256xf32> to vector<1x256xf32>
    %49 = vector.extract_strided_slice %37 {offsets = [16, 0], sizes = [16, 256], strides = [1, 1]} : vector<32x256xf32> to vector<16x256xf32>
    %50 = arith.mulf %44, %49 : vector<16x256xf32>
    %cst_17 = arith.constant dense<0.000000e+00> : vector<256xf32>
    %51 = vector.multi_reduction <add>, %50, %cst_17 [0] : vector<16x256xf32> to vector<256xf32>
    %52 = vector.shape_cast %51 : vector<256xf32> to vector<1x256xf32>
    %53 = arith.addf %14, %48 : vector<1x256xf32>
    %54 = arith.addf %15, %52 : vector<1x256xf32>
    %55 = arith.mulf %53, %53 : vector<1x256xf32>
    %56 = arith.addf %7, %55 : vector<1x256xf32>
    %57 = arith.mulf %54, %54 : vector<1x256xf32>
    %58 = arith.addf %56, %57 : vector<1x256xf32>
    %c1_i32 = arith.constant 1 : i32
    %59 = vector.shape_cast %58 : vector<1x256xf32> to vector<1x1x256xf32>
    %cst_18 = arith.constant dense<0.000000e+00> : vector<1xf32>
    %60 = vector.multi_reduction <add>, %59, %cst_18 [1, 2] : vector<1x1x256xf32> to vector<1xf32>
    %61 = vector.shape_cast %60 : vector<1xf32> to vector<1x1x1xf32>
    %62 = vector.extract %61[0, 0, 0] : f32 from vector<1x1x1xf32>
    %63 = vector.broadcast %62 : f32 to vector<1x128xf32>
    %c0_19 = arith.constant 0 : index
    %c0_20 = arith.constant 0 : index
    %64 = vector.load %arg4[%c0_19, %c0_20] : memref<1x128xf32, #tpu.memory_space<vmem>>, vector<1x128xf32>
    tpu.vector_store %arg4[%c0_19, %c0_20], %63 {strides = array<i32>} : memref<1x128xf32, #tpu.memory_space<vmem>>, vector<1x128xf32>,
    return
  }
  func.func @transform_0(%arg0: i32) -> (i32, i32) {
    %c0_i32 = arith.constant 0 : i32
    %c0_i32_0 = arith.constant 0 : i32
    %c0_i32_1 = arith.constant 0 : i32
    return %c0_i32, %c0_i32_0 : i32, i32
  }
  func.func @transform_1(%arg0: i32) -> (i32, i32, i32) {
    %c0_i32 = arith.constant 0 : i32
    %c0_i32_0 = arith.constant 0 : i32
    %c0_i32_1 = arith.constant 0 : i32
    return %arg0, %c0_i32, %c0_i32_0 : i32, i32, i32
  }
  func.func @transform_2(%arg0: i32) -> (i32, i32, i32) {
    %c0_i32 = arith.constant 0 : i32
    %c0_i32_0 = arith.constant 0 : i32
    %c0_i32_1 = arith.constant 0 : i32
    return %arg0, %c0_i32, %c0_i32_0 : i32, i32, i32
  }
  func.func @transform_3(%arg0: i32) -> (i32, i32) {
    %c0_i32 = arith.constant 0 : i32
    %c0_i32_0 = arith.constant 0 : i32
    return %c0_i32, %arg0 : i32, i32
  }
}

</mosaic_0001>

<llo_original>
// kernel: supervised_loss.1
$region0: #{supervised_loss.1}
  #allocation0 [shape = 'u32[]', space=smem, size = 0x4, offset = 0x4, fixed_abs, tag = 'smem constant byte address 0x4 - core index']
  #allocation1 [shape = 'u32[144,128]{1,0:T(1,128)}', space=vmem, size = 0x12000, scoped, tag = 'internal scratch']
  %s0 = inlined_call_operand.vmem [shape: f32[2,256], index: 0, kind: input, shape index: {}]
  %s1 = inlined_call_operand.vmem [shape: f32[2,2,256], index: 1, kind: input, shape index: {}]
  %s2 = inlined_call_operand.vmem [shape: f32[2,32,16], index: 2, kind: input, shape index: {}]
  %s3 = inlined_call_operand.vmem [shape: f32[1,256], index: 3, kind: output, shape index: {}]
  %s4 = sld [smem:[#allocation0]]
  $region45: #{supervised_loss.1} parent=0
    _
  %s6 = ssub.s32 1, %s4
  %s7 = scalar_select 0, %s6, %s4
  loop: start=0, step=1, limit=4
  $region2: #{supervised_loss.1} parent=0 // loop_pre_header
    _
  $region3: #{supervised_loss.1} parent=0 // loop_header
    %s9 = sphi 0, %s13
    %p10 = scmp.ge.s32.totalorder %s9, 4
    %s17 = sphi 0, %s17
    %s19 = sphi 0, %s17
    %s20 = sphi 0, %s19
    %s34 = sphi 0, %s20
    %s40 = sphi 0, %s42
    %s43 = sphi 0, %s40
    %s44 = sphi 0, %s43
    %s60 = sphi 0, %s44
    %s66 = sphi 0, %s68
    %s69 = sphi 0, %s66
    %s70 = sphi 0, %s69
    %s86 = sphi 0, %s70
    %s92 = sphi 0, %s94
    %s95 = sphi 0, %s92
    %s96 = sphi 0, %s95
    %s112 = sphi 0, %s96
  $region4: #{supervised_loss.1} parent=0 // loop_header_branch
    %12 = sbr.rel (%p10) target = $region8
  $region5: #{supervised_loss.1} parent=0 // loop_body
    %s14 = ssub.s32 %s9, 1
    %s15 = ssub.s32 %s9, 2
    %s16 = sadd.s32 %s9, 1
    %s18 = sadd.s32 %s17, 1
    %p21 = scmp.eq.s32.totalorder %s9, 1
    %p22 = scmp.ne.s32.totalorder %s17, %s19
    %p23 = scmp.eq.s32.totalorder %s9, 0
    %p24 = por %p22, %p23
    %p25 = scmp.ne.s32.totalorder %s17, %s19
    %p26 = scmp.eq.s32.totalorder %s14, 1
    %p27 = por %p25, %p26
    %p28 = scmp.ne.s32.totalorder %s19, %s20
    %p29 = scmp.eq.s32.totalorder %s14, 0
    %p30 = por %p28, %p29
    %p31 = scmp.ne.s32.totalorder %s19, %s20
    %p32 = scmp.eq.s32.totalorder %s15, 1
    %p33 = por %p31, %p32
    %p35 = scmp.ne.s32.totalorder %s20, %s34
    %p36 = scmp.eq.s32.totalorder %s15, 0
    %p37 = por %p35, %p36
    %s38 = ssub.s32 %s9, %s16
    %p39 = scmp.eq.s32.totalorder %s38, 0
    %s41 = sadd.s32 %s40, 1
    %s42 = scalar_select %p39, %s40, %s41
    %p45 = pneg %p39
    %p46 = scmp.eq.s32.totalorder %s9, 1
    %p47 = por %p45, %p46
    %p48 = scmp.ne.s32.totalorder %s40, %s43
    %p49 = scmp.eq.s32.totalorder %s9, 0
    %p50 = por %p48, %p49
    %p51 = scmp.ne.s32.totalorder %s40, %s43
    %p52 = scmp.eq.s32.totalorder %s14, 1
    %p53 = por %p51, %p52
    %p54 = scmp.ne.s32.totalorder %s43, %s44
    %p55 = scmp.eq.s32.totalorder %s14, 0
    %p56 = por %p54, %p55
    %p57 = scmp.ne.s32.totalorder %s43, %s44
    %p58 = scmp.eq.s32.totalorder %s15, 1
    %p59 = por %p57, %p58
    %p61 = scmp.ne.s32.totalorder %s44, %s60
    %p62 = scmp.eq.s32.totalorder %s15, 0
    %p63 = por %p61, %p62
    %s64 = ssub.s32 %s9, %s16
    %p65 = scmp.eq.s32.totalorder %s64, 0
    %s67 = sadd.s32 %s66, 1
    %s68 = scalar_select %p65, %s66, %s67
    %p71 = pneg %p65
    %p72 = scmp.eq.s32.totalorder %s9, 1
    %p73 = por %p71, %p72
    %p74 = scmp.ne.s32.totalorder %s66, %s69
    %p75 = scmp.eq.s32.totalorder %s9, 0
    %p76 = por %p74, %p75
    %p77 = scmp.ne.s32.totalorder %s66, %s69
    %p78 = scmp.eq.s32.totalorder %s14, 1
    %p79 = por %p77, %p78
    %p80 = scmp.ne.s32.totalorder %s69, %s70
    %p81 = scmp.eq.s32.totalorder %s14, 0
    %p82 = por %p80, %p81
    %p83 = scmp.ne.s32.totalorder %s69, %s70
    %p84 = scmp.eq.s32.totalorder %s15, 1
    %p85 = por %p83, %p84
    %p87 = scmp.ne.s32.totalorder %s70, %s86
    %p88 = scmp.eq.s32.totalorder %s15, 0
    %p89 = por %p87, %p88
    %s90 = ssub.s32 %s9, %s16
    %p91 = scmp.eq.s32.totalorder %s90, 0
    %s93 = sadd.s32 %s92, 1
    %s94 = scalar_select %p91, %s92, %s93
    %p97 = pneg %p91
    %p98 = scmp.eq.s32.totalorder %s9, 1
    %p99 = por %p97, %p98
    %p100 = scmp.ne.s32.totalorder %s92, %s95
    %p101 = scmp.eq.s32.totalorder %s9, 0
    %p102 = por %p100, %p101
    %p103 = scmp.ne.s32.totalorder %s92, %s95
    %p104 = scmp.eq.s32.totalorder %s14, 1
    %p105 = por %p103, %p104
    %p106 = scmp.ne.s32.totalorder %s95, %s96
    %p107 = scmp.eq.s32.totalorder %s14, 0
    %p108 = por %p106, %p107
    %p109 = scmp.ne.s32.totalorder %s95, %s96
    %p110 = scmp.eq.s32.totalorder %s15, 1
    %p111 = por %p109, %p110
    %p113 = scmp.ne.s32.totalorder %s96, %s112
    %p114 = scmp.eq.s32.totalorder %s15, 0
    %p115 = por %p113, %p114
    %p116 = scmp.le.s32.totalorder 1, %s9
    %p117 = scmp.lt.s32.totalorder %s9, 3
    %p118 = pnand %p116, %p117
    %p119 = pneg %p118
    // Predicated region
    $region9: #{supervised_loss.1} parent=5 // pred_check
      _
    $region10: #{supervised_loss.1} parent=5 // pred_check_branch
      %121 = sbr.rel (%p118) target = $region12
    $region11: #{supervised_loss.1} parent=5 // pred_region
      %s122 = ssub.s32 %s9, 1
      // Predicated region
      $region13: #{supervised_loss.1} parent=11 // pred_check
        %p123 = pneg %p30
      $region14: #{supervised_loss.1} parent=11 // pred_check_branch
        %125 = sbr.rel (%p123) target = $region16
      $region15: #{supervised_loss.1} parent=11 // pred_region
        _
      $region16: #{supervised_loss.1} parent=11 // pred_fallthru
        _
    $region12: #{supervised_loss.1} parent=5 // pred_fallthru
      _
    %p126 = scmp.lt.s32.totalorder %s9, 2
    // Predicated region
    $region17: #{supervised_loss.1} parent=5 // pred_check
      %p127 = pneg %p126
    $region18: #{supervised_loss.1} parent=5 // pred_check_branch
      %129 = sbr.rel (%p127) target = $region20
    $region19: #{supervised_loss.1} parent=5 // pred_region
      // Predicated region
      $region21: #{supervised_loss.1} parent=19 // pred_check
        %p130 = pneg %p50
      $region22: #{supervised_loss.1} parent=19 // pred_check_branch
        %132 = sbr.rel (%p130) target = $region24
      $region23: #{supervised_loss.1} parent=19 // pred_region
        %p133 = scmp.lt.s32.totalorder %s9, 1
        %s134 = scalar_select %p133, %s9, 1
        %s135 = smul.addr %s134, 2
        %s136 = smul.addr %s135, 2
        %s137 = scalar_lea.vmem %s1, %s136
      $region24: #{supervised_loss.1} parent=19 // pred_fallthru
        _
      // Predicated region
      $region25: #{supervised_loss.1} parent=19 // pred_check
        %p138 = pneg %p76
      $region26: #{supervised_loss.1} parent=19 // pred_check_branch
        %140 = sbr.rel (%p138) target = $region28
      $region27: #{supervised_loss.1} parent=19 // pred_region
        %p141 = scmp.lt.s32.totalorder %s9, 1
        %s142 = scalar_select %p141, %s9, 1
        %s143 = smul.addr %s142, 4
        %s144 = smul.addr %s143, 8
        %s145 = scalar_lea.vmem %s2, %s144
      $region28: #{supervised_loss.1} parent=19 // pred_fallthru
        _
    $region20: #{supervised_loss.1} parent=5 // pred_fallthru
      _
    %p146 = scmp.le.s32.totalorder 1, %s9
    %p147 = scmp.lt.s32.totalorder %s9, 3
    %p148 = pnand %p146, %p147
    %p149 = pneg %p148
    // Predicated region
    $region29: #{supervised_loss.1} parent=5 // pred_check
      _
    $region30: #{supervised_loss.1} parent=5 // pred_check_branch
      %151 = sbr.rel (%p148) target = $region32
    $region31: #{supervised_loss.1} parent=5 // pred_region
      %s152 = ssub.s32 %s9, 1
      %p153 = pneg %p30
      %p154 = pneg %p27
      %p155 = scmp.lt.s32.totalorder %s14, 1
      %s156 = scalar_select %p155, %s14, 1
      %s157 = smul.addr %s156, 2
      %s158 = smul.addr %s157, 2
      %s159 = scalar_lea.vmem %s1, %s158
      %p160 = pneg %p56
      %p161 = pneg %p53
      %p162 = scmp.lt.s32.totalorder %s14, 1
      %s163 = scalar_select %p162, %s14, 1
      %s164 = smul.addr %s163, 4
      %s165 = smul.addr %s164, 8
      %s166 = scalar_lea.vmem %s2, %s165
      %p167 = pneg %p82
      %p168 = pneg %p79
      %p169 = pneg %p108
      %p170 = pneg %p105
      %p171 = scmp.lt.s32.totalorder %s14, 1
      %s172 = scalar_select %p171, %s14, 1
      %s173 = scalar_lea.vmem %s3, %s172
      %p174 = scmp.lt.s32.totalorder %s14, 1
      %s175 = scalar_select %p174, %s14, 1
      %s176 = smul.addr %s175, 2
      %s177 = smul.addr %s176, 2
      %s178 = scalar_lea.vmem %s1, %s177
      %p179 = scmp.lt.s32.totalorder %s14, 1
      %s180 = scalar_select %p179, %s14, 1
      %s181 = smul.addr %s180, 4
      %s182 = smul.addr %s181, 8
      %s183 = scalar_lea.vmem %s2, %s182
      %p184 = scmp.lt.s32.totalorder %s14, 1
      %s185 = scalar_select %p184, %s14, 1
      %s186 = scalar_lea.vmem %s3, %s185
      %v187 = vld [vmem:[%s0] sm:$0xf]
      %v188 = vlaneseq
      %v189 = vshrl.u32 %v188, 7
      %v190 = vadd.s32 %v189, 8
      %v191 = vcvt.s32.f32 %v189
      %v192 = vcvt.s32.f32 %v190
      %v193 = vld [vmem:[%s178] sm:$0xf]
      %v194 = vld [vmem:[%s183] sm:$0xff]
      %v195 = vld [vmem:[%s183 + $0x8] sm:$0xff]
      %v196 = vld [vmem:[%s183 + $0x10] sm:$0xff]
      %v197 = vld [vmem:[%s183 + $0x18] sm:$0xff]
      %v198 = vmul.f32 %v193, 7.5
      %v199 = vadd.f32 %v187, %v198
      %v200 = vmax.f32 %v199, 0.0
      %v201 = vmin.f32 %v200, 15.0
      %v203 = vlaneseq
      %v204 = vshrl.u32 %v203, 7
      %v205 = vsub.s32 1, %v204
      %v206 = vrot.slane %v201, %v205
      %v207 = vlaneseq
      %v208 = vshrl.u32 %v207, 7
      %v209 = vsub.s32 3, %v208
      %v210 = vrot.slane %v201, %v209
      %v213 = vlaneseq
      %v214 = vshrl.u32 %v213, 7
      %v215 = vsub.s32 1, %v214
      %v216 = vrot.slane %v206, %v215
      %v217 = vlaneseq
      %v218 = vshrl.u32 %v217, 7
      %v219 = vsub.s32 1, %v218
      %v220 = vrot.slane %v210, %v219
      %v221 = vsub.f32 %v191, %v216
      %v222 = vsub.f32 %v191, %v220
      %v223 = vsub.f32 %v192, %v216
      %v224 = vsub.f32 %v192, %v220
      %v225 = vand.u32 2147483647, %v221
      %v226 = vand.u32 2147483647, %v222
      %v227 = vand.u32 2147483647, %v223
      %v228 = vand.u32 2147483647, %v224
      %v229 = vsub.f32 1.0, %v225
      %v230 = vsub.f32 1.0, %v226
      %v231 = vsub.f32 1.0, %v227
      %v232 = vsub.f32 1.0, %v228
      %v233 = vmax.f32 %v229, 0.0
      %v234 = vmax.f32 %v230, 0.0
      %v235 = vmax.f32 %v231, 0.0
      %v236 = vmax.f32 %v232, 0.0
      %vm237 = vcmask 130048
      %v239 = vsel %vm237, %v194, 0
      %v242 = vsel %vm237, %v195, 0
      %v245 = vsel %vm237, %v196, 0
      %v248 = vsel %vm237, %v197, 0
      %250 = vmatprep.subr.mxu0 %v234
      %251 = vmatpush1.msra.mxu0 %v233
      %252 = vmatprep.subr.mxu0 %v236
      %253 = vmatpush1.msra.mxu0 %v235
      %254 = vmatprep.subr.mxu0 0.0
      %255 = vmatpush1.msra.mxu0 0.0
      %256 = vmatprep.subr.mxu0 0.0
      %257 = vmatpush1.msra.mxu0 0.0
      %258 = vmatprep.subr.mxu0 0.0
      %259 = vmatpush1.msra.mxu0 0.0
      %260 = vmatprep.subr.mxu0 0.0
      %261 = vmatpush1.msra.mxu0 0.0
      %262 = vmatprep.subr.mxu0 0.0
      %263 = vmatpush1.msra.mxu0 0.0
      %264 = vmatprep.subr.mxu0 0.0
      %265 = vmatpush1.msra.mxu0 0.0
      %266 = vmatprep.subr.mxu0 0.0
      %267 = vmatpush1.msra.mxu0 0.0
      %268 = vmatprep.subr.mxu0 0.0
      %269 = vmatpush1.msra.mxu0 0.0
      %270 = vmatprep.subr.mxu0 0.0
      %271 = vmatpush1.msra.mxu0 0.0
      %272 = vmatprep.subr.mxu0 0.0
      %273 = vmatpush1.msra.mxu0 0.0
      %274 = vmatprep.subr.mxu0 0.0
      %275 = vmatpush1.msra.mxu0 0.0
      %276 = vmatprep.subr.mxu0 0.0
      %277 = vmatpush1.msra.mxu0 0.0
      %278 = vmatprep.subr.mxu0 0.0
      %279 = vmatpush1.msra.mxu0 0.0
      %280 = vmatprep.subr.mxu0 0.0
      %281 = vmatpush1.msra.mxu0 0.0
      %282 = vmatprep.subr.mxu0 0.0
      %283 = vmatpush1.msra.mxu0 0.0
      %284 = vmatprep.subr.mxu0 0.0
      %285 = vmatpush1.msra.mxu0 0.0
      %286 = vmatprep.subr.mxu0 0.0
      %287 = vmatpush1.msra.mxu0 0.0
      %288 = vmatprep.subr.mxu0 0.0
      %289 = vmatpush1.msra.mxu0 0.0
      %290 = vmatprep.subr.mxu0 0.0
      %291 = vmatpush1.msra.mxu0 0.0
      %292 = vmatprep.subr.mxu0 0.0
      %293 = vmatpush1.msra.mxu0 0.0
      %294 = vmatprep.subr.mxu0 0.0
      %295 = vmatpush1.msra.mxu0 0.0
      %296 = vmatprep.subr.mxu0 0.0
      %297 = vmatpush1.msra.mxu0 0.0
      %298 = vmatprep.subr.mxu0 0.0
      %299 = vmatpush1.msra.mxu0 0.0
      %300 = vmatprep.subr.mxu0 0.0
      %301 = vmatpush1.msra.mxu0 0.0
      %302 = vmatprep.subr.mxu0 0.0
      %303 = vmatpush1.msra.mxu0 0.0
      %304 = vmatprep.subr.mxu0 0.0
      %305 = vmatpush1.msra.mxu0 0.0
      %306 = vmatprep.subr.mxu0 0.0
      %307 = vmatpush1.msra.mxu0 0.0
      %308 = vmatprep.subr.mxu0 0.0
      %309 = vmatpush1.msra.mxu0 0.0
      %310 = vmatprep.subr.mxu0 0.0
      %311 = vmatpush1.msra.mxu0 0.0
      %312 = vmatprep.subr.mxu0 0.0
      %313 = vmatpush1.msra.mxu0 0.0
      %314 = vmatprep.mubr.f32.mxu0 0.0
      %315 = vmatmul.mubr.f32.gmra.mrb[0].mxu0 %v239
      %v316 = vpop.f32.mrb[0].mxu0
      %v317 = vadd.f32 0.0, %v316
      %v318 = vpop.f32.mrb[0].mxu0
      %v319 = vadd.f32 0.0, %v318
      %320 = vmatprep.mubr.f32.mxu0 0.0
      %321 = vmatmul.mubr.f32.gmra.mrb[0].mxu0 %v242
      %v322 = vpop.f32.mrb[0].mxu0
      %v323 = vadd.f32 0.0, %v322
      %v324 = vpop.f32.mrb[0].mxu0
      %v325 = vadd.f32 0.0, %v324
      %326 = vmatprep.mubr.f32.mxu0 0.0
      %327 = vmatmul.mubr.f32.gmra.mrb[0].mxu0 %v245
      %v328 = vpop.f32.mrb[0].mxu0
      %v329 = vadd.f32 0.0, %v328
      %v330 = vpop.f32.mrb[0].mxu0
      %v331 = vadd.f32 0.0, %v330
      %332 = vmatprep.mubr.f32.mxu0 0.0
      %333 = vmatmul.mubr.f32.gmra.mrb[0].mxu0 %v248
      %v334 = vpop.f32.mrb[0].mxu0
      %v335 = vadd.f32 0.0, %v334
      %v336 = vpop.f32.mrb[0].mxu0
      %v337 = vadd.f32 0.0, %v336
      %338 = vdwg.mxu0
      %v339 = vlaneseq
      %v340 = vshrl.u32 %v339, 7
      %v341 = vsub.s32 0, %v340
      %v342 = vrot.slane %v201, %v341
      %v343 = vlaneseq
      %v344 = vshrl.u32 %v343, 7
      %v345 = vsub.s32 2, %v344
      %v346 = vrot.slane %v201, %v345
      %v349 = vlaneseq
      %v350 = vshrl.u32 %v349, 7
      %v351 = vsub.s32 0, %v350
      %v352 = vrot.slane %v342, %v351
      %v353 = vlaneseq
      %v354 = vshrl.u32 %v353, 7
      %v355 = vsub.s32 0, %v354
      %v356 = vrot.slane %v346, %v355
      %v357 = vsub.f32 %v191, %v352
      %v358 = vsub.f32 %v191, %v356
      %v359 = vsub.f32 %v192, %v352
      %v360 = vsub.f32 %v192, %v356
      %v361 = vand.u32 2147483647, %v357
      %v362 = vand.u32 2147483647, %v358
      %v363 = vand.u32 2147483647, %v359
      %v364 = vand.u32 2147483647, %v360
      %v365 = vsub.f32 1.0, %v361
      %v366 = vsub.f32 1.0, %v362
      %v367 = vsub.f32 1.0, %v363
      %v368 = vsub.f32 1.0, %v364
      %v369 = vmax.f32 %v365, 0.0
      %v370 = vmax.f32 %v366, 0.0
      %v371 = vmax.f32 %v367, 0.0
      %v372 = vmax.f32 %v368, 0.0
      %v373 = vmul.f32 %v369, %v317
      %v374 = vmul.f32 %v370, %v319
      %v375 = vmul.f32 %v371, %v323
      %v376 = vmul.f32 %v372, %v325
      %v377 = vadd.f32 %v373, %v375
      %v378 = vrot.slane %v377, 4
      %v379 = vadd.f32 %v377, %v378
      %v380 = vrot.slane %v379, 2
      %v381 = vadd.f32 %v379, %v380
      %v382 = vrot.slane %v381, 1
      %v383 = vadd.f32 %v381, %v382
      %v384 = vadd.f32 %v374, %v376
      %v385 = vrot.slane %v384, 4
      %v386 = vadd.f32 %v384, %v385
      %v387 = vrot.slane %v386, 2
      %v388 = vadd.f32 %v386, %v387
      %v389 = vrot.slane %v388, 1
      %v390 = vadd.f32 %v388, %v389
      %v391 = vmul.f32 %v369, %v329
      %v392 = vmul.f32 %v370, %v331
      %v393 = vmul.f32 %v371, %v335
      %v394 = vmul.f32 %v372, %v337
      %v395 = vadd.f32 %v391, %v393
      %v396 = vrot.slane %v395, 4
      %v397 = vadd.f32 %v395, %v396
      %v398 = vrot.slane %v397, 2
      %v399 = vadd.f32 %v397, %v398
      %v400 = vrot.slane %v399, 1
      %v401 = vadd.f32 %v399, %v400
      %v402 = vadd.f32 %v392, %v394
      %v403 = vrot.slane %v402, 4
      %v404 = vadd.f32 %v402, %v403
      %v405 = vrot.slane %v404, 2
      %v406 = vadd.f32 %v404, %v405
      %v407 = vrot.slane %v406, 1
      %v408 = vadd.f32 %v406, %v407
      %v411 = vcombine.low %v383, %v390
      %v413 = vunpack.c.l.s4 1983009808
      %v414 = vunpack.c.0.s8 %v413
      %v415 = vlaneseq
      %v416 = vshrl.u32 %v415, 7
      %v417 = vsub.s32 %v414, %v416
      %v418 = vrot.slane %v411, %v417
      %v420 = vadd.f32 %v193, %v418
      %v423 = vcombine.low %v401, %v408
      %v425 = vunpack.c.l.s4 1983009808
      %v426 = vunpack.c.0.s8 %v425
      %v427 = vlaneseq
      %v428 = vshrl.u32 %v427, 7
      %v429 = vsub.s32 %v426, %v428
      %v430 = vrot.slane %v423, %v429
      %v431 = vrot.slane %v430, 7
      %v433 = vadd.f32 %v193, %v431
      %v434 = vmul.f32 %v420, %v420
      %v435 = vadd.f32 %v434, 0.0
      %v436 = vmul.f32 %v433, %v433
      %v438 = vrot.slane %v436, 7
      %v439 = vrot.slane %v438, 2
      %v441 = vadd.f32 %v435, %v439
      %v443 = vlaneseq
      %v444 = vshrl.u32 %v443, 7
      %v445 = vsub.s32 0, %v444
      %v446 = vrot.slane %v441, %v445
      %v447 = vlaneseq
      %v448 = vshrl.u32 %v447, 7
      %v449 = vsub.s32 2, %v448
      %v450 = vrot.slane %v441, %v449
      %vm453 = vcmask 1040384
      %v454 = vsel %vm453, %v446, 0.0
      %v455 = vsel %vm453, %v450, 0.0
      %v456 = vadd.f32 %v454, %v455
      %457 = vadd.xlane.f32.xlu0 %v456
      %v458 = vpop.xlane.xlu0 %457
      %v459 = vrot.slane %v458, 4
      %v460 = vadd.f32 %v458, %v459
      %v461 = vrot.slane %v460, 2
      %v462 = vadd.f32 %v460, %v461
      %v463 = vrot.slane %v462, 1
      %v464 = vadd.f32 %v462, %v463
      %s465 = vtos %v464
      %v466 = vstv %s465
      %467 = vst [vmem:[%s186] sm:$0x1] %v466
      %p468 = scmp.lt.s32.totalorder %s14, 1
      %s469 = scalar_select %p468, %s14, 1
      %s470 = scalar_lea.vmem %s3, %s469
      // Predicated region
      $region33: #{supervised_loss.1} parent=31 // pred_check
        %p471 = pneg %p105
      $region34: #{supervised_loss.1} parent=31 // pred_check_branch
        %473 = sbr.rel (%p471) target = $region36
      $region35: #{supervised_loss.1} parent=31 // pred_region
        _
      $region36: #{supervised_loss.1} parent=31 // pred_fallthru
        _
    $region32: #{supervised_loss.1} parent=5 // pred_fallthru
      _
    %p474 = scmp.le.s32.totalorder 2, %s9
    // Predicated region
    $region37: #{supervised_loss.1} parent=5 // pred_check
      %p475 = pneg %p474
    $region38: #{supervised_loss.1} parent=5 // pred_check_branch
      %477 = sbr.rel (%p475) target = $region40
    $region39: #{supervised_loss.1} parent=5 // pred_region
      %s478 = ssub.s32 %s9, 2
      // Predicated region
      $region41: #{supervised_loss.1} parent=39 // pred_check
        %p479 = pneg %p111
      $region42: #{supervised_loss.1} parent=39 // pred_check_branch
        %481 = sbr.rel (%p479) target = $region44
      $region43: #{supervised_loss.1} parent=39 // pred_region
        %p482 = scmp.lt.s32.totalorder %s15, 1
        %s483 = scalar_select %p482, %s15, 1
        %s484 = scalar_lea.vmem %s3, %s483
      $region44: #{supervised_loss.1} parent=39 // pred_fallthru
        _
    $region40: #{supervised_loss.1} parent=5 // pred_fallthru
      _
  $region6: #{supervised_loss.1} parent=0 // loop_footer
    %s13 = sadd.s32 1, %s9
  $region7: #{supervised_loss.1} parent=0 // loop_footer_branch
    %8 = sbr.rel target = $region3
  $region8: #{supervised_loss.1} parent=0 // loop_exit
    _

</llo_original>
